<compile_context>
chip_gen: v7x
topology: tpu7x:2x2x1
jax: 0.10.0
libtpu: 0.0.40
codegen_flags: <defaults>
</compile_context>

<pallas_src>
from functools import partial

import numpy as np
import jax
import jax.numpy as jnp
from jax.experimental import pallas as pl
from jax.experimental.pallas import tpu as pltpu

EPS = 1e-5


def _conv1x1(x_f32, w_f32, use_mxu):
    """1x1 conv on one tile: x (C_in, T) f32, w (C_out, C_in) f32 -> (C_out, T) f32."""
    if use_mxu:
        return jnp.dot(w_f32, x_f32, preferred_element_type=jnp.float32)
    # Tiny-C path: unrolled VPU broadcast-FMA (outer-product accumulation).
    c_in = x_f32.shape[0]
    y = w_f32[:, 0:1] * x_f32[0:1, :]            # (C_out,1)*(1,T) -> (C_out,T)
    for k in range(1, c_in):
        y = y + w_f32[:, k:k + 1] * x_f32[k:k + 1, :]
    return y


def _stats_kernel(x_ref, w_ref, g_ref, b_ref, scale_ref, bias_ref,
                  sumx_sc, ssq_sc, *, single, n_total, use_mxu):
    """Pass 1: accumulate sum(x) per input channel and sum(y^2) per output channel
    across all tiles; finalize fused BN scale/bias at the last grid step."""
    b = pl.program_id(0)
    m = pl.program_id(1)

    @pl.when(jnp.logical_and(b == 0, m == 0))
    def _():
        sumx_sc[...] = jnp.zeros_like(sumx_sc)
        ssq_sc[...] = jnp.zeros_like(ssq_sc)

    x = x_ref[...].astype(jnp.float32)           # (C_in, TM)
    y = _conv1x1(x, w_ref[...], use_mxu)         # (C_out, TM) f32

    sumx_sc[...] += jnp.sum(x, axis=1, keepdims=True)
    ssq_sc[...] += jnp.sum(y * y, axis=1, keepdims=True)

    @pl.when(jnp.logical_and(b == pl.num_programs(0) - 1,
                             m == pl.num_programs(1) - 1))
    def _():
        # sum over (B, H*W) of y, per output channel, via linearity of the conv.
        sum_y = _conv1x1(sumx_sc[...], w_ref[...], use_mxu)   # (C_out, 1)
        if single:
            # Global stats over all (B, C_out, H*W) elements.
            mean = jnp.sum(sum_y) / n_total
            var = jnp.sum(ssq_sc[...]) / n_total - mean * mean
        else:
            # Per-output-channel stats over (B, H*W).
            mean = sum_y / n_total
            var = ssq_sc[...] / n_total - mean * mean
        # Guard against cancellation-induced tiny negatives (biased var >= 0).
        # TODO(synk): for extremely large M / large-magnitude activations a shifted /
        # Welford-style accumulation would be more robust than sumsq - mean^2.
        var = jnp.maximum(var, 0.0)
        inv = jax.lax.rsqrt(var + EPS)
        scale = g_ref[...] * inv                 # (C_out, 1)
        scale_ref[...] = scale
        bias_ref[...] = b_ref[...] - mean * scale


def _normalize_kernel(x_ref, w_ref, scale_ref, bias_ref, o_ref, *, use_mxu):
    """Pass 2: recompute 1x1 conv per tile, apply y*scale + bias, ReLU."""
    x = x_ref[...].astype(jnp.float32)           # (C_in, TM)
    y = _conv1x1(x, w_ref[...], use_mxu)         # (C_out, TM)
    yhat = y * scale_ref[...] + bias_ref[...]
    o_ref[...] = jnp.maximum(yhat, 0.0).astype(o_ref.dtype)


def _pick_tile(hw, max_tm):
    """Largest multiple of 128 that divides HW and is <= max_tm; else full extent."""
    if hw <= max_tm:
        return hw
    for cand in range(max_tm - (max_tm % 128), 0, -128):
        if hw % cand == 0:
            return cand
    # TODO(synk): HW with no 128-multiple divisor <= max_tm falls back to the full
    # extent (correct but may use a large block); a padded/masked tile would be nicer.
    return hw


def shared_mlp_single(x_nchw, conv_w, gamma, beta, bn_mode, *, max_tm=2048, use_mxu=None):
    """x_nchw: (B, C_in, H, W); conv_w: (C_out, C_in, 1, 1). Returns (B, C_out, H, W)."""
    B, C_in, H, W = x_nchw.shape
    C_out = conv_w.shape[0]
    HW = H * W

    # Free reshapes only (no XLA transposes, no upcast of the activation tensor).
    x3 = x_nchw.reshape(B, C_in, HW)
    w2d = conv_w.reshape(C_out, C_in).astype(jnp.float32)

    if use_mxu is None:
        use_mxu = (C_in >= 64 and C_out >= 64)

    single = (bn_mode == "single")
    gamma = gamma.astype(jnp.float32)
    beta = beta.astype(jnp.float32)
    if single:
        g = jnp.broadcast_to(gamma.reshape(1, 1), (C_out, 1))
        bt = jnp.broadcast_to(beta.reshape(1, 1), (C_out, 1))
        n_total = float(B * HW * C_out)
    else:
        g = gamma.reshape(C_out, 1)
        bt = beta.reshape(C_out, 1)
        n_total = float(B * HW)

    # VMEM-aware cap on the spatial tile: rough f32 working set per spatial column
    # (x tile, upcast copy, y, output), double-buffered.  Keeps blocks well under the
    # scoped VMEM limit on all generations (v5e/v6e/v7x).
    per_col_bytes = 4 * (2 * C_in + 2 * C_out)
    budget_bytes = 8 * 1024 * 1024
    cap = max(128, min(max_tm, (budget_bytes // max(per_col_bytes, 1)) // 128 * 128))
    tm = _pick_tile(HW, cap)
    n_m = HW // tm

    cp_stats = pltpu.CompilerParams(
        dimension_semantics=("arbitrary", "arbitrary"),   # cross-tile accumulation
        vmem_limit_bytes=32 * 1024 * 1024)
    cp_norm = pltpu.CompilerParams(
        dimension_semantics=("parallel", "parallel"),     # independent tiles
        vmem_limit_bytes=32 * 1024 * 1024)

    x_spec = pl.BlockSpec((pl.Squeezed(), C_in, tm), lambda b, m: (b, 0, m))
    w_spec = pl.BlockSpec((C_out, C_in), lambda b, m: (0, 0))
    cin_spec = pl.BlockSpec((C_in, 1), lambda b, m: (0, 0))
    cout_spec = pl.BlockSpec((C_out, 1), lambda b, m: (0, 0))
    del cin_spec  # (kept naming symmetric; scratch handles the C_in accumulator)

    # Pass 1: batch statistics -> fused (scale, bias) per output channel.
    scale, bias = pl.pallas_call(
        partial(_stats_kernel, single=single, n_total=n_total, use_mxu=use_mxu),
        out_shape=(jax.ShapeDtypeStruct((C_out, 1), jnp.float32),
                   jax.ShapeDtypeStruct((C_out, 1), jnp.float32)),
        grid=(B, n_m),
        in_specs=[x_spec, w_spec, cout_spec, cout_spec],
        out_specs=(cout_spec, cout_spec),
        scratch_shapes=[pltpu.VMEM((C_in, 1), jnp.float32),
                        pltpu.VMEM((C_out, 1), jnp.float32)],
        compiler_params=cp_stats,
    )(x3, w2d, g, bt)

    # Pass 2: conv + y*scale + bias + ReLU, lane-dense (C_out, tm) output tiles.
    out3 = pl.pallas_call(
        partial(_normalize_kernel, use_mxu=use_mxu),
        out_shape=jax.ShapeDtypeStruct((B, C_out, HW), x_nchw.dtype),
        grid=(B, n_m),
        in_specs=[x_spec, w_spec, cout_spec, cout_spec],
        out_specs=pl.BlockSpec((pl.Squeezed(), C_out, tm), lambda b, m: (b, 0, m)),
        compiler_params=cp_norm,
    )(x3, w2d, scale, bias)

    return out3.reshape(B, C_out, H, W)   # free reshape back to NCHW


def reference(x, conv_w, gamma, beta, bn_mode):
    """Pure-JAX reference matching the PyTorch forward (train-mode BN)."""
    C_out = conv_w.shape[0]
    w2d = conv_w.reshape(C_out, -1).astype(jnp.float32)
    y = jnp.einsum("oc,bchw->bohw", w2d, x.astype(jnp.float32))
    if bn_mode == "single":
        mean = jnp.mean(y)
        var = jnp.mean((y - mean) ** 2)
        yhat = (y - mean) / jnp.sqrt(var + EPS) * gamma[0] + beta[0]
    else:
        mean = jnp.mean(y, axis=(0, 2, 3), keepdims=True)
        var = jnp.mean((y - mean) ** 2, axis=(0, 2, 3), keepdims=True)
        yhat = (y - mean) / jnp.sqrt(var + EPS) * gamma.reshape(1, -1, 1, 1) \
               + beta.reshape(1, -1, 1, 1)
    return jnp.maximum(yhat, 0.0)


if __name__ == "__main__":
    B, CH_in, CH_out, H, W = 2, 4, 8, 16, 16

    key = jax.random.PRNGKey(0)
    kx, kw, kg, kb = jax.random.split(key, 4)
    x = jax.random.normal(kx, (B, CH_in, H, W), dtype=jnp.float32)
    # nn.Conv2d(CH_in, CH_out, (1,1), bias=False) weight shape: (CH_out, CH_in, 1, 1)
    conv_w = jax.random.normal(kw, (CH_out, CH_in, 1, 1), dtype=jnp.float32) * 0.2

    ok = True
    for bn_mode in ("single", "per_channel"):
        nfeat = 1 if bn_mode == "single" else CH_out
        gamma = 1.0 + 0.1 * jax.random.normal(kg, (nfeat,), dtype=jnp.float32)
        beta = 0.1 * jax.random.normal(kb, (nfeat,), dtype=jnp.float32)
        # TODO(synk): BatchNorm running-stat updates (module state mutation) are not
        # modeled; they do not affect the forward output in training mode.
        out = shared_mlp_single(x, conv_w, gamma, beta, bn_mode)
        out = jax.block_until_ready(out)
        ref = reference(x, conv_w, gamma, beta, bn_mode)
        assert out.shape == (B, CH_out, H, W)
        ok &= bool(np.allclose(np.asarray(out), np.asarray(ref), rtol=1e-4, atol=1e-4))

    if ok:
        print("KERNEL_OK")
    else:
        print("KERNEL_MISMATCH")
</pallas_src>

<mosaic_0001>
module attributes {stable_mosaic.version = 11 : i64} {
  func.func @_stats_kernel(%arg0: i32, %arg1: i32, %arg2: memref<1x4x256xf32, #tpu.memory_space<vmem>>, %arg3: memref<8x4xf32, #tpu.memory_space<vmem>>, %arg4: memref<8x1xf32, #tpu.memory_space<vmem>>, %arg5: memref<8x1xf32, #tpu.memory_space<vmem>>, %arg6: memref<8x1xf32, #tpu.memory_space<vmem>>, %arg7: memref<8x1xf32, #tpu.memory_space<vmem>>, %arg8: memref<4x1xf32, #tpu.memory_space<vmem>>, %arg9: memref<8x1xf32, #tpu.memory_space<vmem>>) attributes {dimension_semantics = [#tpu.dimension_semantics<arbitrary>, #tpu.dimension_semantics<arbitrary>], iteration_bounds = array<i64: 2, 1>, scalar_prefetch = 0 : i64, scratch_operands = 2 : i64, tpu.core_type = #tpu.core_type<tc>, window_params = [{transform_indices = @transform_0, window_bounds = array<i64: 1, 4, 256>}, {pipeline_mode = #tpu.pipeline_mode<synchronous>, transform_indices = @transform_1, window_bounds = array<i64: 8, 4>}, {pipeline_mode = #tpu.pipeline_mode<synchronous>, transform_indices = @transform_2, window_bounds = array<i64: 8, 1>}, {pipeline_mode = #tpu.pipeline_mode<synchronous>, transform_indices = @transform_3, window_bounds = array<i64: 8, 1>}, {pipeline_mode = #tpu.pipeline_mode<synchronous>, transform_indices = @transform_4, window_bounds = array<i64: 8, 1>}, {pipeline_mode = #tpu.pipeline_mode<synchronous>, transform_indices = @transform_5, window_bounds = array<i64: 8, 1>}]} {
    %c0_i32 = arith.constant 0 : i32
    %0 = arith.cmpi eq, %arg0, %c0_i32 : i32
    %c0_i32_0 = arith.constant 0 : i32
    %1 = arith.cmpi eq, %arg1, %c0_i32_0 : i32
    %2 = arith.andi %0, %1 : i1
    %3 = arith.extui %2 : i1 to i32
    %c0_i32_1 = arith.constant 0 : i32
    %4 = arith.cmpi ne, %3, %c0_i32_1 : i32
    scf.if %4 {
      %cst_17 = arith.constant 0.000000e+00 : f32
      %47 = vector.broadcast %cst_17 : f32 to vector<4x1xf32>
      %c0_18 = arith.constant 0 : index
      %c0_19 = arith.constant 0 : index
      %48 = vector.load %arg8[%c0_18, %c0_19] : memref<4x1xf32, #tpu.memory_space<vmem>>, vector<4x1xf32>
      tpu.vector_store %arg8[%c0_18, %c0_19], %47 {strides = array<i32>} : memref<4x1xf32, #tpu.memory_space<vmem>>, vector<4x1xf32>,
      %cst_20 = arith.constant 0.000000e+00 : f32
      %49 = vector.broadcast %cst_20 : f32 to vector<8x1xf32>
      %c0_21 = arith.constant 0 : index
      %c0_22 = arith.constant 0 : index
      %50 = vector.load %arg9[%c0_21, %c0_22] : memref<8x1xf32, #tpu.memory_space<vmem>>, vector<8x1xf32>
      tpu.vector_store %arg9[%c0_21, %c0_22], %49 {strides = array<i32>} : memref<8x1xf32, #tpu.memory_space<vmem>>, vector<8x1xf32>,
    } else {
    }
    %c0 = arith.constant 0 : index
    %c0_2 = arith.constant 0 : index
    %c0_3 = arith.constant 0 : index
    %5 = vector.load %arg2[%c0, %c0_2, %c0_3] : memref<1x4x256xf32, #tpu.memory_space<vmem>>, vector<1x4x256xf32>
    %6 = vector.shape_cast %5 : vector<1x4x256xf32> to vector<4x256xf32>
    %c0_4 = arith.constant 0 : index
    %c0_5 = arith.constant 0 : index
    %7 = vector.load %arg3[%c0_4, %c0_5] : memref<8x4xf32, #tpu.memory_space<vmem>>, vector<8x4xf32>
    %8 = vector.extract_strided_slice %7 {offsets = [0, 0], sizes = [8, 1], strides = [1, 1]} : vector<8x4xf32> to vector<8x1xf32>
    %9 = vector.extract_strided_slice %6 {offsets = [0, 0], sizes = [1, 256], strides = [1, 1]} : vector<4x256xf32> to vector<1x256xf32>
    %10 = vector.broadcast %8 : vector<8x1xf32> to vector<8x256xf32>
    %11 = vector.broadcast %9 : vector<1x256xf32> to vector<8x256xf32>
    %12 = arith.mulf %10, %11 : vector<8x256xf32>
    %13 = vector.extract_strided_slice %7 {offsets = [0, 1], sizes = [8, 1], strides = [1, 1]} : vector<8x4xf32> to vector<8x1xf32>
    %14 = vector.extract_strided_slice %6 {offsets = [1, 0], sizes = [1, 256], strides = [1, 1]} : vector<4x256xf32> to vector<1x256xf32>
    %15 = vector.broadcast %13 : vector<8x1xf32> to vector<8x256xf32>
    %16 = vector.broadcast %14 : vector<1x256xf32> to vector<8x256xf32>
    %17 = arith.mulf %15, %16 : vector<8x256xf32>
    %18 = arith.addf %12, %17 : vector<8x256xf32>
    %19 = vector.extract_strided_slice %7 {offsets = [0, 2], sizes = [8, 1], strides = [1, 1]} : vector<8x4xf32> to vector<8x1xf32>
    %20 = vector.extract_strided_slice %6 {offsets = [2, 0], sizes = [1, 256], strides = [1, 1]} : vector<4x256xf32> to vector<1x256xf32>
    %21 = vector.broadcast %19 : vector<8x1xf32> to vector<8x256xf32>
    %22 = vector.broadcast %20 : vector<1x256xf32> to vector<8x256xf32>
    %23 = arith.mulf %21, %22 : vector<8x256xf32>
    %24 = arith.addf %18, %23 : vector<8x256xf32>
    %25 = vector.extract_strided_slice %7 {offsets = [0, 3], sizes = [8, 1], strides = [1, 1]} : vector<8x4xf32> to vector<8x1xf32>
    %26 = vector.extract_strided_slice %6 {offsets = [3, 0], sizes = [1, 256], strides = [1, 1]} : vector<4x256xf32> to vector<1x256xf32>
    %27 = vector.broadcast %25 : vector<8x1xf32> to vector<8x256xf32>
    %28 = vector.broadcast %26 : vector<1x256xf32> to vector<8x256xf32>
    %29 = arith.mulf %27, %28 : vector<8x256xf32>
    %30 = arith.addf %24, %29 : vector<8x256xf32>
    %c0_6 = arith.constant 0 : index
    %c0_7 = arith.constant 0 : index
    %31 = vector.load %arg8[%c0_6, %c0_7] : memref<4x1xf32, #tpu.memory_space<vmem>>, vector<4x1xf32>
    %cst = arith.constant dense<0.000000e+00> : vector<4xf32>
    %32 = vector.multi_reduction <add>, %6, %cst [1] : vector<4x256xf32> to vector<4xf32>
    %33 = vector.shape_cast %32 : vector<4xf32> to vector<4x1xf32>
    %34 = arith.addf %31, %33 : vector<4x1xf32>
    %c0_8 = arith.constant 0 : index
    %c0_9 = arith.constant 0 : index
    %35 = vector.load %arg8[%c0_8, %c0_9] : memref<4x1xf32, #tpu.memory_space<vmem>>, vector<4x1xf32>
    tpu.vector_store %arg8[%c0_8, %c0_9], %34 {strides = array<i32>} : memref<4x1xf32, #tpu.memory_space<vmem>>, vector<4x1xf32>,
    %c0_10 = arith.constant 0 : index
    %c0_11 = arith.constant 0 : index
    %36 = vector.load %arg9[%c0_10, %c0_11] : memref<8x1xf32, #tpu.memory_space<vmem>>, vector<8x1xf32>
    %37 = arith.mulf %30, %30 : vector<8x256xf32>
    %cst_12 = arith.constant dense<0.000000e+00> : vector<8xf32>
    %38 = vector.multi_reduction <add>, %37, %cst_12 [1] : vector<8x256xf32> to vector<8xf32>
    %39 = vector.shape_cast %38 : vector<8xf32> to vector<8x1xf32>
    %40 = arith.addf %36, %39 : vector<8x1xf32>
    %c0_13 = arith.constant 0 : index
    %c0_14 = arith.constant 0 : index
    %41 = vector.load %arg9[%c0_13, %c0_14] : memref<8x1xf32, #tpu.memory_space<vmem>>, vector<8x1xf32>
    tpu.vector_store %arg9[%c0_13, %c0_14], %40 {strides = array<i32>} : memref<8x1xf32, #tpu.memory_space<vmem>>, vector<8x1xf32>,
    %c1_i32 = arith.constant 1 : i32
    %42 = arith.cmpi eq, %arg0, %c1_i32 : i32
    %c0_i32_15 = arith.constant 0 : i32
    %43 = arith.cmpi eq, %arg1, %c0_i32_15 : i32
    %44 = arith.andi %42, %43 : i1
    %45 = arith.extui %44 : i1 to i32
    %c0_i32_16 = arith.constant 0 : i32
    %46 = arith.cmpi ne, %45, %c0_i32_16 : i32
    scf.if %46 {
      %c0_17 = arith.constant 0 : index
      %c0_18 = arith.constant 0 : index
      %47 = vector.load %arg8[%c0_17, %c0_18] : memref<4x1xf32, #tpu.memory_space<vmem>>, vector<4x1xf32>
      %c0_19 = arith.constant 0 : index
      %c0_20 = arith.constant 0 : index
      %48 = vector.load %arg3[%c0_19, %c0_20] : memref<8x4xf32, #tpu.memory_space<vmem>>, vector<8x4xf32>
      %49 = vector.extract_strided_slice %48 {offsets = [0, 0], sizes = [8, 1], strides = [1, 1]} : vector<8x4xf32> to vector<8x1xf32>
      %50 = vector.extract_strided_slice %47 {offsets = [0, 0], sizes = [1, 1], strides = [1, 1]} : vector<4x1xf32> to vector<1x1xf32>
      %51 = vector.broadcast %50 : vector<1x1xf32> to vector<8x1xf32>
      %52 = arith.mulf %49, %51 : vector<8x1xf32>
      %53 = vector.extract_strided_slice %48 {offsets = [0, 1], sizes = [8, 1], strides = [1, 1]} : vector<8x4xf32> to vector<8x1xf32>
      %54 = vector.extract_strided_slice %47 {offsets = [1, 0], sizes = [1, 1], strides = [1, 1]} : vector<4x1xf32> to vector<1x1xf32>
      %55 = vector.broadcast %54 : vector<1x1xf32> to vector<8x1xf32>
      %56 = arith.mulf %53, %55 : vector<8x1xf32>
      %57 = arith.addf %52, %56 : vector<8x1xf32>
      %58 = vector.extract_strided_slice %48 {offsets = [0, 2], sizes = [8, 1], strides = [1, 1]} : vector<8x4xf32> to vector<8x1xf32>
      %59 = vector.extract_strided_slice %47 {offsets = [2, 0], sizes = [1, 1], strides = [1, 1]} : vector<4x1xf32> to vector<1x1xf32>
      %60 = vector.broadcast %59 : vector<1x1xf32> to vector<8x1xf32>
      %61 = arith.mulf %58, %60 : vector<8x1xf32>
      %62 = arith.addf %57, %61 : vector<8x1xf32>
      %63 = vector.extract_strided_slice %48 {offsets = [0, 3], sizes = [8, 1], strides = [1, 1]} : vector<8x4xf32> to vector<8x1xf32>
      %64 = vector.extract_strided_slice %47 {offsets = [3, 0], sizes = [1, 1], strides = [1, 1]} : vector<4x1xf32> to vector<1x1xf32>
      %65 = vector.broadcast %64 : vector<1x1xf32> to vector<8x1xf32>
      %66 = arith.mulf %63, %65 : vector<8x1xf32>
      %67 = arith.addf %62, %66 : vector<8x1xf32>
      %68 = vector.shape_cast %67 : vector<8x1xf32> to vector<1x8x1xf32>
      %cst_21 = arith.constant dense<0.000000e+00> : vector<1xf32>
      %69 = vector.multi_reduction <add>, %68, %cst_21 [1, 2] : vector<1x8x1xf32> to vector<1xf32>
      %70 = vector.shape_cast %69 : vector<1xf32> to vector<1x1x1xf32>
      %71 = vector.extract %70[0, 0, 0] : f32 from vector<1x1x1xf32>
      %cst_22 = arith.constant 4.096000e+03 : f32
      %72 = arith.divf %71, %cst_22 : f32
      %c0_23 = arith.constant 0 : index
      %c0_24 = arith.constant 0 : index
      %73 = vector.load %arg9[%c0_23, %c0_24] : memref<8x1xf32, #tpu.memory_space<vmem>>, vector<8x1xf32>
      %74 = vector.shape_cast %73 : vector<8x1xf32> to vector<1x8x1xf32>
      %cst_25 = arith.constant dense<0.000000e+00> : vector<1xf32>
      %75 = vector.multi_reduction <add>, %74, %cst_25 [1, 2] : vector<1x8x1xf32> to vector<1xf32>
      %76 = vector.shape_cast %75 : vector<1xf32> to vector<1x1x1xf32>
      %77 = vector.extract %76[0, 0, 0] : f32 from vector<1x1x1xf32>
      %cst_26 = arith.constant 4.096000e+03 : f32
      %78 = arith.divf %77, %cst_26 : f32
      %79 = arith.mulf %72, %72 : f32
      %80 = arith.subf %78, %79 : f32
      %cst_27 = arith.constant 0.000000e+00 : f32
      %81 = arith.maximumf %80, %cst_27 : f32
      %cst_28 = arith.constant 9.99999974E-6 : f32
      %82 = arith.addf %81, %cst_28 : f32
      %83 = math.rsqrt %82 : f32
      %c0_29 = arith.constant 0 : index
      %c0_30 = arith.constant 0 : index
      %84 = vector.load %arg4[%c0_29, %c0_30] : memref<8x1xf32, #tpu.memory_space<vmem>>, vector<8x1xf32>
      %85 = vector.broadcast %83 : f32 to vector<8x1xf32>
      %86 = arith.mulf %84, %85 : vector<8x1xf32>
      %c0_31 = arith.constant 0 : index
      %c0_32 = arith.constant 0 : index
      %87 = vector.load %arg6[%c0_31, %c0_32] : memref<8x1xf32, #tpu.memory_space<vmem>>, vector<8x1xf32>
      tpu.vector_store %arg6[%c0_31, %c0_32], %86 {strides = array<i32>} : memref<8x1xf32, #tpu.memory_space<vmem>>, vector<8x1xf32>,
      %c0_33 = arith.constant 0 : index
      %c0_34 = arith.constant 0 : index
      %88 = vector.load %arg5[%c0_33, %c0_34] : memref<8x1xf32, #tpu.memory_space<vmem>>, vector<8x1xf32>
      %89 = vector.broadcast %72 : f32 to vector<8x1xf32>
      %90 = arith.mulf %89, %86 : vector<8x1xf32>
      %91 = arith.subf %88, %90 : vector<8x1xf32>
      %c0_35 = arith.constant 0 : index
      %c0_36 = arith.constant 0 : index
      %92 = vector.load %arg7[%c0_35, %c0_36] : memref<8x1xf32, #tpu.memory_space<vmem>>, vector<8x1xf32>
      tpu.vector_store %arg7[%c0_35, %c0_36], %91 {strides = array<i32>} : memref<8x1xf32, #tpu.memory_space<vmem>>, vector<8x1xf32>,
    } else {
    }
    return
  }
  func.func @transform_0(%arg0: i32, %arg1: i32) -> (i32, i32, i32) {
    %c0_i32 = arith.constant 0 : i32
    %c0_i32_0 = arith.constant 0 : i32
    return %arg0, %c0_i32, %arg1 : i32, i32, i32
  }
  func.func @transform_1(%arg0: i32, %arg1: i32) -> (i32, i32) {
    %c0_i32 = arith.constant 0 : i32
    %c0_i32_0 = arith.constant 0 : i32
    %c0_i32_1 = arith.constant 0 : i32
    return %c0_i32, %c0_i32_0 : i32, i32
  }
  func.func @transform_2(%arg0: i32, %arg1: i32) -> (i32, i32) {
    %c0_i32 = arith.constant 0 : i32
    %c0_i32_0 = arith.constant 0 : i32
    %c0_i32_1 = arith.constant 0 : i32
    return %c0_i32, %c0_i32_0 : i32, i32
  }
  func.func @transform_3(%arg0: i32, %arg1: i32) -> (i32, i32) {
    %c0_i32 = arith.constant 0 : i32
    %c0_i32_0 = arith.constant 0 : i32
    %c0_i32_1 = arith.constant 0 : i32
    return %c0_i32, %c0_i32_0 : i32, i32
  }
  func.func @transform_4(%arg0: i32, %arg1: i32) -> (i32, i32) {
    %c0_i32 = arith.constant 0 : i32
    %c0_i32_0 = arith.constant 0 : i32
    %c0_i32_1 = arith.constant 0 : i32
    return %c0_i32, %c0_i32_0 : i32, i32
  }
  func.func @transform_5(%arg0: i32, %arg1: i32) -> (i32, i32) {
    %c0_i32 = arith.constant 0 : i32
    %c0_i32_0 = arith.constant 0 : i32
    %c0_i32_1 = arith.constant 0 : i32
    return %c0_i32, %c0_i32_0 : i32, i32
  }
}

</mosaic_0001>

<llo_original>
// kernel: tpu_custom_call.1
$region0: #{tpu_custom_call.1}
  #allocation0 [shape = 'u32[]', space=smem, size = 0x4, offset = 0x4, fixed_abs, tag = 'smem constant byte address 0x4 - core index']
  #allocation1 [shape = 'u32[144,128]{1,0:T(1,128)}', space=vmem, size = 0x12000, scoped, tag = 'internal scratch']
  #allocation2 [shape = 'f32[4,1]{1,0:T(4,128)}', space=vmem, size = 0x800, scoped, tag = 'scratch operand']
  #allocation3 [shape = 'f32[8,1]{1,0:T(8,128)}', space=vmem, size = 0x1000, scoped, tag = 'scratch operand']
  %s0 = inlined_call_operand.vmem [shape: f32[2,4,256], index: 0, kind: input, shape index: {}]
  %s1 = inlined_call_operand.vmem [shape: f32[8,4], index: 1, kind: input, shape index: {}]
  %s2 = inlined_call_operand.vmem [shape: f32[8,1], index: 2, kind: input, shape index: {}]
  %s3 = inlined_call_operand.vmem [shape: f32[8,1], index: 3, kind: input, shape index: {}]
  %s4 = inlined_call_operand.vmem [shape: f32[8,1], index: 4, kind: output, shape index: {0}]
  %s5 = inlined_call_operand.vmem [shape: f32[8,1], index: 5, kind: output, shape index: {1}]
  %6 = xla_tuple %s4, %s5
  %s7 = sld [smem:[#allocation0]]
  $region65: #{tpu_custom_call.1} parent=0
    _
  %s9 = ssub.s32 1, %s7
  %s10 = scalar_select 0, %s9, %s7
  loop: start=0, step=1, limit=4
  $region2: #{tpu_custom_call.1} parent=0 // loop_pre_header
    _
  $region3: #{tpu_custom_call.1} parent=0 // loop_header
    %s12 = sphi 0, %s16
    %p13 = scmp.ge.s32.totalorder %s12, 4
    %s19 = sphi 0, %s31
    %s20 = sphi 0, %s27
    %s21 = sphi 0, %s19
    %s22 = sphi 0, %s20
    %s23 = sphi 0, %s21
    %s24 = sphi 0, %s22
    %s36 = sphi 0, %s38
    %s39 = sphi 0, %s36
    %s40 = sphi 0, %s39
    %s56 = sphi 0, %s40
    %s60 = sphi 0, %s60
    %s62 = sphi 0, %s60
    %s63 = sphi 0, %s62
    %s77 = sphi 0, %s63
    %s81 = sphi 0, %s81
    %s83 = sphi 0, %s81
    %s84 = sphi 0, %s83
    %s98 = sphi 0, %s84
    %s102 = sphi 0, %s102
    %s104 = sphi 0, %s102
    %s105 = sphi 0, %s104
    %s119 = sphi 0, %s105
    %s123 = sphi 0, %s123
    %s125 = sphi 0, %s123
    %s126 = sphi 0, %s125
    %s140 = sphi 0, %s126
    %s144 = sphi 0, %s144
    %s146 = sphi 0, %s144
    %s147 = sphi 0, %s146
    %s161 = sphi 0, %s147
  $region4: #{tpu_custom_call.1} parent=0 // loop_header_branch
    %15 = sbr.rel (%p13) target = $region8
  $region5: #{tpu_custom_call.1} parent=0 // loop_body
    %s17 = ssub.s32 %s12, 1
    %s18 = ssub.s32 %s12, 2
    %s25 = sadd.s32 1, %s20
    %p26 = scmp.ge.s32.totalorder %s25, 1
    %s27 = scalar_select %p26, 0, %s25
    %s28 = sadd.s32 1, %s19
    %s29 = scalar_select %p26, %s28, %s19
    %p30 = scmp.ge.s32.totalorder %s29, 2
    %s31 = scalar_select %p30, 0, %s29
    %s32 = ssub.s32 %s19, %s31
    %s33 = ssub.s32 %s20, %s27
    %s34 = sor.u32 %s32, %s33
    %p35 = scmp.eq.s32.totalorder %s34, 0
    %s37 = sadd.s32 %s36, 1
    %s38 = scalar_select %p35, %s36, %s37
    %p41 = pneg %p35
    %p42 = scmp.eq.s32.totalorder %s12, 1
    %p43 = por %p41, %p42
    %p44 = scmp.ne.s32.totalorder %s36, %s39
    %p45 = scmp.eq.s32.totalorder %s12, 0
    %p46 = por %p44, %p45
    %p47 = scmp.ne.s32.totalorder %s36, %s39
    %p48 = scmp.eq.s32.totalorder %s17, 1
    %p49 = por %p47, %p48
    %p50 = scmp.ne.s32.totalorder %s39, %s40
    %p51 = scmp.eq.s32.totalorder %s17, 0
    %p52 = por %p50, %p51
    %p53 = scmp.ne.s32.totalorder %s39, %s40
    %p54 = scmp.eq.s32.totalorder %s18, 1
    %p55 = por %p53, %p54
    %p57 = scmp.ne.s32.totalorder %s40, %s56
    %p58 = scmp.eq.s32.totalorder %s18, 0
    %p59 = por %p57, %p58
    %s61 = sadd.s32 %s60, 1
    %p64 = scmp.eq.s32.totalorder %s12, 1
    %p65 = scmp.ne.s32.totalorder %s60, %s62
    %p66 = scmp.eq.s32.totalorder %s12, 0
    %p67 = por %p65, %p66
    %p68 = scmp.ne.s32.totalorder %s60, %s62
    %p69 = scmp.eq.s32.totalorder %s17, 1
    %p70 = por %p68, %p69
    %p71 = scmp.ne.s32.totalorder %s62, %s63
    %p72 = scmp.eq.s32.totalorder %s17, 0
    %p73 = por %p71, %p72
    %p74 = scmp.ne.s32.totalorder %s62, %s63
    %p75 = scmp.eq.s32.totalorder %s18, 1
    %p76 = por %p74, %p75
    %p78 = scmp.ne.s32.totalorder %s63, %s77
    %p79 = scmp.eq.s32.totalorder %s18, 0
    %p80 = por %p78, %p79
    %s82 = sadd.s32 %s81, 1
    %p85 = scmp.eq.s32.totalorder %s12, 1
    %p86 = scmp.ne.s32.totalorder %s81, %s83
    %p87 = scmp.eq.s32.totalorder %s12, 0
    %p88 = por %p86, %p87
    %p89 = scmp.ne.s32.totalorder %s81, %s83
    %p90 = scmp.eq.s32.totalorder %s17, 1
    %p91 = por %p89, %p90
    %p92 = scmp.ne.s32.totalorder %s83, %s84
    %p93 = scmp.eq.s32.totalorder %s17, 0
    %p94 = por %p92, %p93
    %p95 = scmp.ne.s32.totalorder %s83, %s84
    %p96 = scmp.eq.s32.totalorder %s18, 1
    %p97 = por %p95, %p96
    %p99 = scmp.ne.s32.totalorder %s84, %s98
    %p100 = scmp.eq.s32.totalorder %s18, 0
    %p101 = por %p99, %p100
    %s103 = sadd.s32 %s102, 1
    %p106 = scmp.eq.s32.totalorder %s12, 1
    %p107 = scmp.ne.s32.totalorder %s102, %s104
    %p108 = scmp.eq.s32.totalorder %s12, 0
    %p109 = por %p107, %p108
    %p110 = scmp.ne.s32.totalorder %s102, %s104
    %p111 = scmp.eq.s32.totalorder %s17, 1
    %p112 = por %p110, %p111
    %p113 = scmp.ne.s32.totalorder %s104, %s105
    %p114 = scmp.eq.s32.totalorder %s17, 0
    %p115 = por %p113, %p114
    %p116 = scmp.ne.s32.totalorder %s104, %s105
    %p117 = scmp.eq.s32.totalorder %s18, 1
    %p118 = por %p116, %p117
    %p120 = scmp.ne.s32.totalorder %s105, %s119
    %p121 = scmp.eq.s32.totalorder %s18, 0
    %p122 = por %p120, %p121
    %s124 = sadd.s32 %s123, 1
    %p127 = scmp.eq.s32.totalorder %s12, 1
    %p128 = scmp.ne.s32.totalorder %s123, %s125
    %p129 = scmp.eq.s32.totalorder %s12, 0
    %p130 = por %p128, %p129
    %p131 = scmp.ne.s32.totalorder %s123, %s125
    %p132 = scmp.eq.s32.totalorder %s17, 1
    %p133 = por %p131, %p132
    %p134 = scmp.ne.s32.totalorder %s125, %s126
    %p135 = scmp.eq.s32.totalorder %s17, 0
    %p136 = por %p134, %p135
    %p137 = scmp.ne.s32.totalorder %s125, %s126
    %p138 = scmp.eq.s32.totalorder %s18, 1
    %p139 = por %p137, %p138
    %p141 = scmp.ne.s32.totalorder %s126, %s140
    %p142 = scmp.eq.s32.totalorder %s18, 0
    %p143 = por %p141, %p142
    %s145 = sadd.s32 %s144, 1
    %p148 = scmp.eq.s32.totalorder %s12, 1
    %p149 = scmp.ne.s32.totalorder %s144, %s146
    %p150 = scmp.eq.s32.totalorder %s12, 0
    %p151 = por %p149, %p150
    %p152 = scmp.ne.s32.totalorder %s144, %s146
    %p153 = scmp.eq.s32.totalorder %s17, 1
    %p154 = por %p152, %p153
    %p155 = scmp.ne.s32.totalorder %s146, %s147
    %p156 = scmp.eq.s32.totalorder %s17, 0
    %p157 = por %p155, %p156
    %p158 = scmp.ne.s32.totalorder %s146, %s147
    %p159 = scmp.eq.s32.totalorder %s18, 1
    %p160 = por %p158, %p159
    %p162 = scmp.ne.s32.totalorder %s147, %s161
    %p163 = scmp.eq.s32.totalorder %s18, 0
    %p164 = por %p162, %p163
    %p165 = scmp.le.s32.totalorder 1, %s12
    %p166 = scmp.lt.s32.totalorder %s12, 3
    %p167 = pnand %p165, %p166
    %p168 = pneg %p167
    // Predicated region
    $region9: #{tpu_custom_call.1} parent=5 // pred_check
      _
    $region10: #{tpu_custom_call.1} parent=5 // pred_check_branch
      %170 = sbr.rel (%p167) target = $region12
    $region11: #{tpu_custom_call.1} parent=5 // pred_region
      %s171 = ssub.s32 %s12, 1
      // Predicated region
      $region13: #{tpu_custom_call.1} parent=11 // pred_check
        %p172 = pneg %p73
      $region14: #{tpu_custom_call.1} parent=11 // pred_check_branch
        %174 = sbr.rel (%p172) target = $region16
      $region15: #{tpu_custom_call.1} parent=11 // pred_region
        _
      $region16: #{tpu_custom_call.1} parent=11 // pred_fallthru
        _
      // Predicated region
      $region17: #{tpu_custom_call.1} parent=11 // pred_check
        %p175 = pneg %p94
      $region18: #{tpu_custom_call.1} parent=11 // pred_check_branch
        %177 = sbr.rel (%p175) target = $region20
      $region19: #{tpu_custom_call.1} parent=11 // pred_region
        _
      $region20: #{tpu_custom_call.1} parent=11 // pred_fallthru
        _
      // Predicated region
      $region21: #{tpu_custom_call.1} parent=11 // pred_check
        %p178 = pneg %p115
      $region22: #{tpu_custom_call.1} parent=11 // pred_check_branch
        %180 = sbr.rel (%p178) target = $region24
      $region23: #{tpu_custom_call.1} parent=11 // pred_region
        _
      $region24: #{tpu_custom_call.1} parent=11 // pred_fallthru
        _
    $region12: #{tpu_custom_call.1} parent=5 // pred_fallthru
      _
    %p181 = scmp.lt.s32.totalorder %s12, 2
    // Predicated region
    $region25: #{tpu_custom_call.1} parent=5 // pred_check
      %p182 = pneg %p181
    $region26: #{tpu_custom_call.1} parent=5 // pred_check_branch
      %184 = sbr.rel (%p182) target = $region28
    $region27: #{tpu_custom_call.1} parent=5 // pred_region
      // Predicated region
      $region29: #{tpu_custom_call.1} parent=27 // pred_check
        %p185 = pneg %p46
      $region30: #{tpu_custom_call.1} parent=27 // pred_check_branch
        %187 = sbr.rel (%p185) target = $region32
      $region31: #{tpu_custom_call.1} parent=27 // pred_region
        %s188 = smul.u32 2, %s20
        %p189 = scmp.lt.s32.totalorder %s19, 1
        %s190 = scalar_select %p189, %s19, 1
        %p191 = scmp.lt.s32.totalorder %s188, 1
        %s192 = scalar_select %p191, %s188, 1
        %s193 = smul.addr %s190, 2
        %s194 = sadd.s32 %s192, %s193
        %s195 = smul.addr %s194, 4
        %s196 = scalar_lea.vmem %s0, %s195
        %s197 = smul.u32 2, %s20
      $region32: #{tpu_custom_call.1} parent=27 // pred_fallthru
        _
    $region28: #{tpu_custom_call.1} parent=5 // pred_fallthru
      _
    %p198 = scmp.le.s32.totalorder 1, %s12
    %p199 = scmp.lt.s32.totalorder %s12, 3
    %p200 = pnand %p198, %p199
    %p201 = pneg %p200
    // Predicated region
    $region33: #{tpu_custom_call.1} parent=5 // pred_check
      _
    $region34: #{tpu_custom_call.1} parent=5 // pred_check_branch
      %203 = sbr.rel (%p200) target = $region36
    $region35: #{tpu_custom_call.1} parent=5 // pred_region
      %s204 = ssub.s32 %s12, 1
      %s205 = smul.u32 2, %s22
      %p206 = scmp.lt.s32.totalorder %s21, 1
      %s207 = scalar_select %p206, %s21, 1
      %p208 = scmp.lt.s32.totalorder %s205, 1
      %s209 = scalar_select %p208, %s205, 1
      %s210 = smul.addr %s207, 2
      %s211 = sadd.s32 %s209, %s210
      %s212 = smul.addr %s211, 4
      %s213 = scalar_lea.vmem %s0, %s212
      %p214 = pneg %p52
      %p215 = pneg %p49
      %p216 = pneg %p73
      %p217 = pneg %p70
      %p218 = pneg %p94
      %p219 = pneg %p91
      %p220 = pneg %p115
      %p221 = pneg %p112
      %p222 = pneg %p136
      %p223 = pneg %p133
      %p224 = pneg %p157
      %p225 = pneg %p154
      %s226 = smul.u32 2, %s22
      %p227 = scmp.lt.s32.totalorder %s21, 1
      %s228 = scalar_select %p227, %s21, 1
      %p229 = scmp.lt.s32.totalorder %s226, 1
      %s230 = scalar_select %p229, %s226, 1
      %s231 = smul.addr %s228, 2
      %s232 = sadd.s32 %s230, %s231
      %s233 = smul.addr %s232, 4
      %s234 = scalar_lea.vmem %s0, %s233
      %s235 = smul.u32 2, %s22
      %p236 = scmp.eq.s32.totalorder %s21, 0
      %p237 = scmp.eq.s32.totalorder %s22, 0
      %p238 = pnand %p236, %p237
      %p239 = pneg %p238
      // Predicated region
      $region37: #{tpu_custom_call.1} parent=35 // pred_check
        _
      $region38: #{tpu_custom_call.1} parent=35 // pred_check_branch
        %241 = sbr.rel (%p238) target = $region40
      $region39: #{tpu_custom_call.1} parent=35 // pred_region
        %vm242 = vcmask 3072
        %243 = vst.msk [vmem:[#allocation2] sm:$0xf] %vm242, 0.0
        %vm244 = vcmask 7168
        %245 = vst.msk [vmem:[#allocation3] sm:$0xff] %vm244, 0.0
      $region40: #{tpu_custom_call.1} parent=35 // pred_fallthru
        _
      %v246 = vld [vmem:[%s234] sm:$0xff]
      %v247 = vld [vmem:[%s1] sm:$0xff]
      %249 = vset.pattern.permute.xlu0 0
      %250 = vperm.xlu0 %249, %v247
      %v251 = vpop.permute.xlu0 %250
      %v254 = vlaneseq
      %v255 = vshrl.u32 %v254, 7
      %v256 = vsub.s32 0, %v255
      %v257 = vrot.slane %v246, %v256
      %v258 = vlaneseq
      %v259 = vshrl.u32 %v258, 7
      %v260 = vsub.s32 4, %v259
      %v261 = vrot.slane %v246, %v260
      %v264 = vlaneseq
      %v265 = vshrl.u32 %v264, 7
      %v266 = vsub.s32 0, %v265
      %v267 = vrot.slane %v257, %v266
      %v268 = vlaneseq
      %v269 = vshrl.u32 %v268, 7
      %v270 = vsub.s32 0, %v269
      %v271 = vrot.slane %v261, %v270
      %v272 = vmul.f32 %v251, %v267
      %v273 = vmul.f32 %v251, %v271
      %274 = vset.pattern.permute.xlu0 1
      %275 = vperm.xlu0 %274, %v247
      %v276 = vpop.permute.xlu0 %275
      %v278 = vlaneseq
      %v279 = vshrl.u32 %v278, 7
      %v280 = vsub.s32 1, %v279
      %v281 = vrot.slane %v246, %v280
      %v282 = vlaneseq
      %v283 = vshrl.u32 %v282, 7
      %v284 = vsub.s32 5, %v283
      %v285 = vrot.slane %v246, %v284
      %v288 = vlaneseq
      %v289 = vshrl.u32 %v288, 7
      %v290 = vsub.s32 1, %v289
      %v291 = vrot.slane %v281, %v290
      %v292 = vlaneseq
      %v293 = vshrl.u32 %v292, 7
      %v294 = vsub.s32 1, %v293
      %v295 = vrot.slane %v285, %v294
      %v296 = vmul.f32 %v276, %v291
      %v297 = vmul.f32 %v276, %v295
      %v298 = vadd.f32 %v272, %v296
      %v299 = vadd.f32 %v273, %v297
      %300 = vset.pattern.permute.xlu0 2
      %301 = vperm.xlu0 %300, %v247
      %v302 = vpop.permute.xlu0 %301
      %v304 = vlaneseq
      %v305 = vshrl.u32 %v304, 7
      %v306 = vsub.s32 2, %v305
      %v307 = vrot.slane %v246, %v306
      %v308 = vlaneseq
      %v309 = vshrl.u32 %v308, 7
      %v310 = vsub.s32 6, %v309
      %v311 = vrot.slane %v246, %v310
      %v314 = vlaneseq
      %v315 = vshrl.u32 %v314, 7
      %v316 = vsub.s32 2, %v315
      %v317 = vrot.slane %v307, %v316
      %v318 = vlaneseq
      %v319 = vshrl.u32 %v318, 7
      %v320 = vsub.s32 2, %v319
      %v321 = vrot.slane %v311, %v320
      %v322 = vmul.f32 %v302, %v317
      %v323 = vmul.f32 %v302, %v321
      %v324 = vadd.f32 %v298, %v322
      %v325 = vadd.f32 %v299, %v323
      %326 = vset.pattern.permute.xlu0 3
      %327 = vperm.xlu0 %326, %v247
      %v328 = vpop.permute.xlu0 %327
      %v330 = vlaneseq
      %v331 = vshrl.u32 %v330, 7
      %v332 = vsub.s32 3, %v331
      %v333 = vrot.slane %v246, %v332
      %v334 = vlaneseq
      %v335 = vshrl.u32 %v334, 7
      %v336 = vsub.s32 7, %v335
      %v337 = vrot.slane %v246, %v336
      %v340 = vlaneseq
      %v341 = vshrl.u32 %v340, 7
      %v342 = vsub.s32 3, %v341
      %v343 = vrot.slane %v333, %v342
      %v344 = vlaneseq
      %v345 = vshrl.u32 %v344, 7
      %v346 = vsub.s32 3, %v345
      %v347 = vrot.slane %v337, %v346
      %v348 = vmul.f32 %v328, %v343
      %v349 = vmul.f32 %v328, %v347
      %v350 = vadd.f32 %v324, %v348
      %v351 = vadd.f32 %v325, %v349
      %v352 = vld [vmem:[#allocation2] sm:$0xf]
      %v353 = vcombine.high %v246, %v246
      %vm355 = vcmask 1043456
      %v356 = vsel %vm355, %v246, 0.0
      %v357 = vsel %vm355, %v353, 0.0
      %v358 = vadd.f32 %v356, %v357
      %359 = vadd.xlane.f32.xlu0 %v358
      %v360 = vpop.xlane.xlu0 %359
      %v361 = vadd.f32 %v352, %v360
      %vm362 = vcmask 3072
      %363 = vst.msk [vmem:[#allocation2] sm:$0xf] %vm362, %v361
      %v364 = vld [vmem:[#allocation3] sm:$0xff]
      %v365 = vmul.f32 %v350, %v350
      %v366 = vmul.f32 %v351, %v351
      %v367 = vadd.f32 %v365, %v366
      %368 = vadd.xlane.f32.xlu0 %v367
      %v369 = vpop.xlane.xlu0 %368
      %v370 = vadd.f32 %v364, %v369
      %vm371 = vcmask 7168
      %372 = vst.msk [vmem:[#allocation3] sm:$0xff] %vm371, %v370
      %p373 = scmp.eq.s32.totalorder %s21, 1
      %p374 = pnand %p373, %p237
      %p375 = pneg %p374
      // Predicated region
      $region41: #{tpu_custom_call.1} parent=35 // pred_check
        _
      $region42: #{tpu_custom_call.1} parent=35 // pred_check_branch
        %377 = sbr.rel (%p374) target = $region44
      $region43: #{tpu_custom_call.1} parent=35 // pred_region
        %v378 = vld [vmem:[#allocation2] sm:$0xf]
        %v379 = vld [vmem:[%s1] sm:$0xff]
        %v380 = vlaneseq
        %v381 = vshrl.u32 %v380, 7
        %v382 = vsub.s32 0, %v381
        %v383 = vrot.slane %v378, %v382
        %v384 = vmul.f32 %v379, %v383
        %v385 = vlaneseq
        %v386 = vshrl.u32 %v385, 7
        %v387 = vsub.s32 1, %v386
        %v388 = vrot.slane %v378, %v387
        %390 = vrot.lane.b32.xlu0 %v388, 1
        %v391 = vpop.permute.xlu0 %390
        %v393 = vmul.f32 %v379, %v391
        %395 = vrot.lane.b32.xlu0 %v393, 127
        %v396 = vpop.permute.xlu0 %395
        %v398 = vadd.f32 %v384, %v396
        %v399 = vlaneseq
        %v400 = vshrl.u32 %v399, 7
        %v401 = vsub.s32 2, %v400
        %v402 = vrot.slane %v378, %v401
        %404 = vrot.lane.b32.xlu0 %v402, 2
        %v405 = vpop.permute.xlu0 %404
        %v407 = vmul.f32 %v379, %v405
        %409 = vrot.lane.b32.xlu0 %v407, 126
        %v410 = vpop.permute.xlu0 %409
        %v412 = vadd.f32 %v398, %v410
        %v413 = vlaneseq
        %v414 = vshrl.u32 %v413, 7
        %v415 = vsub.s32 3, %v414
        %v416 = vrot.slane %v378, %v415
        %418 = vrot.lane.b32.xlu0 %v416, 3
        %v419 = vpop.permute.xlu0 %418
        %v421 = vmul.f32 %v379, %v419
        %423 = vrot.lane.b32.xlu0 %v421, 125
        %v424 = vpop.permute.xlu0 %423
        %v426 = vadd.f32 %v412, %v424
        %v427 = vsel %vm371, %v426, 0.0
        %428 = vadd.xlane.f32.xlu0 %v427
        %v429 = vpop.xlane.xlu0 %428
        %v430 = vrot.slane %v429, 4
        %v431 = vadd.f32 %v429, %v430
        %v432 = vrot.slane %v431, 2
        %v433 = vadd.f32 %v431, %v432
        %v434 = vrot.slane %v433, 1
        %v435 = vadd.f32 %v433, %v434
        %s436 = vtos %v435
        %v437 = vrcp.pop 4096.0
        %s438 = vtos %v437
        %s439 = smul.f32 %s436, %s438
        %v440 = vld [vmem:[#allocation3] sm:$0xff]
        %v441 = vsel %vm371, %v440, 0.0
        %442 = vadd.xlane.f32.xlu0 %v441
        %v443 = vpop.xlane.xlu0 %442
        %v444 = vrot.slane %v443, 4
        %v445 = vadd.f32 %v443, %v444
        %v446 = vrot.slane %v445, 2
        %v447 = vadd.f32 %v445, %v446
        %v448 = vrot.slane %v447, 1
        %v449 = vadd.f32 %v447, %v448
        %s450 = vtos %v449
        %v451 = vrcp.pop 4096.0
        %s452 = vtos %v451
        %s453 = smul.f32 %s450, %s452
        %s454 = smul.f32 %s439, %s439
        %s455 = ssub.f32 %s453, %s454
        %s456 = smax.f32 %s455, 0.0
        %s457 = sadd.f32 %s456, 1e-05
        %v458 = vstv %s457
        %v459 = vrsqrt.pop %v458
        %s460 = vtos %v459
        %v461 = vld [vmem:[%s2] sm:$0xff]
        %v462 = vstv %s460
        %v463 = vmul.f32 %v461, %v462
        %464 = vst.msk [vmem:[%s4] sm:$0xff] %vm371, %v463
        %v465 = vld [vmem:[%s3] sm:$0xff]
        %v466 = vstv %s439
        %v467 = vmul.f32 %v466, %v463
        %v468 = vsub.f32 %v465, %v467
        %469 = vst.msk [vmem:[%s5] sm:$0xff] %vm371, %v468
      $region44: #{tpu_custom_call.1} parent=35 // pred_fallthru
        _
      // Predicated region
      $region45: #{tpu_custom_call.1} parent=35 // pred_check
        %p470 = pneg %p133
      $region46: #{tpu_custom_call.1} parent=35 // pred_check_branch
        %472 = sbr.rel (%p470) target = $region48
      $region47: #{tpu_custom_call.1} parent=35 // pred_region
        _
      $region48: #{tpu_custom_call.1} parent=35 // pred_fallthru
        _
      // Predicated region
      $region49: #{tpu_custom_call.1} parent=35 // pred_check
        %p473 = pneg %p154
      $region50: #{tpu_custom_call.1} parent=35 // pred_check_branch
        %475 = sbr.rel (%p473) target = $region52
      $region51: #{tpu_custom_call.1} parent=35 // pred_region
        _
      $region52: #{tpu_custom_call.1} parent=35 // pred_fallthru
        _
      // Predicated region
      $region53: #{tpu_custom_call.1} parent=35 // pred_check
        %p476 = pneg %p133
      $region54: #{tpu_custom_call.1} parent=35 // pred_check_branch
        %478 = sbr.rel (%p476) target = $region56
      $region55: #{tpu_custom_call.1} parent=35 // pred_region
        _
      $region56: #{tpu_custom_call.1} parent=35 // pred_fallthru
        _
      // Predicated region
      $region57: #{tpu_custom_call.1} parent=35 // pred_check
        %p479 = pneg %p154
      $region58: #{tpu_custom_call.1} parent=35 // pred_check_branch
        %481 = sbr.rel (%p479) target = $region60
      $region59: #{tpu_custom_call.1} parent=35 // pred_region
        _
      $region60: #{tpu_custom_call.1} parent=35 // pred_fallthru
        _
    $region36: #{tpu_custom_call.1} parent=5 // pred_fallthru
      _
    %p482 = scmp.le.s32.totalorder 2, %s12
    // Predicated region
    $region61: #{tpu_custom_call.1} parent=5 // pred_check
      %p483 = pneg %p482
    $region62: #{tpu_custom_call.1} parent=5 // pred_check_branch
      %485 = sbr.rel (%p483) target = $region64
    $region63: #{tpu_custom_call.1} parent=5 // pred_region
      %s486 = ssub.s32 %s12, 2
    $region64: #{tpu_custom_call.1} parent=5 // pred_fallthru
      _
  $region6: #{tpu_custom_call.1} parent=0 // loop_footer
    %s16 = sadd.s32 1, %s12
  $region7: #{tpu_custom_call.1} parent=0 // loop_footer_branch
    %11 = sbr.rel target = $region3
  $region8: #{tpu_custom_call.1} parent=0 // loop_exit
    _

</llo_original>
